<compile_context>
chip_gen: v7x
topology: tpu7x:2x2x1
jax: 0.10.0
libtpu: 0.0.40
codegen_flags: <defaults>
</compile_context>

<pallas_src>
import functools

import jax
import jax.numpy as jnp
from jax.experimental import pallas as pl
from jax.experimental.pallas import tpu as pltpu


def _round_up(x, m):
    return ((x + m - 1) // m) * m


# ----------------------------------------------------------------------------
# Pooler (ROIAlign, single FPN scale) -- plain JAX glue, channels-last gather.
# TODO(synk): data-dependent bilinear gather of ROIAlign has no clean BlockSpec
#             expression; kept in JAX (vmap + gather) rather than a Pallas
#             scalar-prefetch DMA kernel.
# ----------------------------------------------------------------------------
def _bilinear_sample(feat, ys, xs):
    """feat: (H, W, C); ys: (Ny,); xs: (Nx,) -> (Ny, Nx, C)."""
    H, W, C = feat.shape
    valid_y = (ys >= -1.0) & (ys <= float(H))
    valid_x = (xs >= -1.0) & (xs <= float(W))
    y = jnp.clip(ys, 0.0, H - 1.0)
    x = jnp.clip(xs, 0.0, W - 1.0)
    y0 = jnp.floor(y).astype(jnp.int32)
    x0 = jnp.floor(x).astype(jnp.int32)
    y1 = jnp.minimum(y0 + 1, H - 1)
    x1 = jnp.minimum(x0 + 1, W - 1)
    ly = y - y0.astype(feat.dtype)
    lx = x - x0.astype(feat.dtype)
    hy = 1.0 - ly
    hx = 1.0 - lx

    f_y0 = feat[y0]                # (Ny, W, C)  -- gather over H, C on lanes
    f_y1 = feat[y1]
    f00 = f_y0[:, x0]              # (Ny, Nx, C)
    f01 = f_y0[:, x1]
    f10 = f_y1[:, x0]
    f11 = f_y1[:, x1]

    w00 = (hy[:, None] * hx[None, :])[:, :, None]
    w01 = (hy[:, None] * lx[None, :])[:, :, None]
    w10 = (ly[:, None] * hx[None, :])[:, :, None]
    w11 = (ly[:, None] * lx[None, :])[:, :, None]
    out = f00 * w00 + f01 * w01 + f10 * w10 + f11 * w11
    valid = (valid_y[:, None] & valid_x[None, :]).astype(feat.dtype)[:, :, None]
    return out * valid


def _roi_align_one(feats_nhwc, batch_idx, box, *, resolution, spatial_scale,
                   sampling_ratio):
    """feats_nhwc: (N, H, W, C); box: (4,) image coords (x1,y1,x2,y2)."""
    feat = feats_nhwc[batch_idx]                 # (H, W, C)
    R = resolution
    sr = sampling_ratio
    x1, y1, x2, y2 = box * spatial_scale
    roi_w = jnp.maximum(x2 - x1, 1.0)
    roi_h = jnp.maximum(y2 - y1, 1.0)
    bin_h = roi_h / R
    bin_w = roi_w / R
    sub = (jnp.arange(sr, dtype=feat.dtype) + 0.5) / sr          # (sr,)
    ys = y1 + (jnp.arange(R, dtype=feat.dtype)[:, None] + sub[None, :]) * bin_h
    xs = x1 + (jnp.arange(R, dtype=feat.dtype)[:, None] + sub[None, :]) * bin_w
    samples = _bilinear_sample(feat, ys.reshape(-1), xs.reshape(-1))
    samples = samples.reshape(R, sr, R, sr, -1)
    pooled = samples.mean(axis=(1, 3))           # (R, R, C)
    # Back to (C, R, R) so the downstream flatten matches x.view(N, -1).
    return jnp.transpose(pooled, (2, 0, 1))


def pooler(feats, rois, *, resolution, spatial_scale, sampling_ratio=2):
    """feats: (N, C, H, W); rois: (R, 5) = (batch_idx, x1, y1, x2, y2)."""
    feats_nhwc = jnp.transpose(feats, (0, 2, 3, 1))   # channels-last gathers
    batch_idx = rois[:, 0].astype(jnp.int32)
    boxes = rois[:, 1:]
    fn = functools.partial(_roi_align_one, resolution=resolution,
                           spatial_scale=spatial_scale,
                           sampling_ratio=sampling_ratio)
    return jax.vmap(lambda b, bx: fn(feats_nhwc, b, bx))(batch_idx, boxes)


# ----------------------------------------------------------------------------
# Fused fc6 -> ReLU -> fc7 -> ReLU  (Pallas kernel)
#   grid = (num ROI tiles, num K tiles); K (fc6 reduction) axis is last and
#   "arbitrary"; acc_ref is an f32 VMEM accumulator, bias folded into init.
# ----------------------------------------------------------------------------
def _mlp_kernel(x_ref, w6_ref, b6_ref, w7_ref, b7_ref, o_ref, acc_ref):
    k = pl.program_id(1)

    @pl.when(k == 0)
    def _init():
        # Fold fc6 bias into the accumulator init (broadcast hoisted here,
        # outside the K accumulation).
        acc_ref[...] = jnp.broadcast_to(b6_ref[...], acc_ref.shape)

    acc_ref[...] += jnp.dot(x_ref[...], w6_ref[...],
                            preferred_element_type=jnp.float32)

    @pl.when(k == pl.num_programs(1) - 1)
    def _finalize():
        h = jnp.maximum(acc_ref[...], 0.0).astype(w7_ref.dtype)   # bf16 for fc7
        y = jnp.dot(h, w7_ref[...], preferred_element_type=jnp.float32)
        y = y + b7_ref[...]
        o_ref[...] = jnp.maximum(y, 0.0).astype(o_ref.dtype)


def mlp_head(x, w6, b6, w7, b7, *, roi_tile=128, k_tile=512):
    """x: (R, D_in) flattened pooled features -> (R, rep)."""
    R, d_in = x.shape
    rep = w6.shape[1]

    # Pad every dimension to MXU/lane-friendly multiples.
    r_pad = _round_up(max(R, 1), roi_tile)
    rep_pad = _round_up(rep, 128)
    d_pad128 = _round_up(d_in, 128)
    tk = d_pad128 if d_pad128 <= k_tile else k_tile
    d_pad = _round_up(d_pad128, tk)

    # bf16 activations / weights, f32 biases + accumulation.
    x_p = jnp.pad(x, ((0, r_pad - R), (0, d_pad - d_in))).astype(jnp.bfloat16)
    w6_p = jnp.pad(w6, ((0, d_pad - d_in), (0, rep_pad - rep))).astype(jnp.bfloat16)
    w7_p = jnp.pad(w7, ((0, rep_pad - rep), (0, rep_pad - rep))).astype(jnp.bfloat16)
    b6_p = jnp.pad(b6, (0, rep_pad - rep)).reshape(1, rep_pad).astype(jnp.float32)
    b7_p = jnp.pad(b7, (0, rep_pad - rep)).reshape(1, rep_pad).astype(jnp.float32)

    grid = (r_pad // roi_tile, d_pad // tk)

    out = pl.pallas_call(
        _mlp_kernel,
        out_shape=jax.ShapeDtypeStruct((r_pad, rep_pad), jnp.float32),
        grid_spec=pltpu.PrefetchScalarGridSpec(
            num_scalar_prefetch=0,
            grid=grid,
            in_specs=[
                pl.BlockSpec((roi_tile, tk), lambda i, k: (i, k)),     # x
                pl.BlockSpec((tk, rep_pad), lambda i, k: (k, 0)),      # w6 (streamed)
                pl.BlockSpec((1, rep_pad), lambda i, k: (0, 0)),       # b6
                pl.BlockSpec((rep_pad, rep_pad), lambda i, k: (0, 0)),  # w7
                pl.BlockSpec((1, rep_pad), lambda i, k: (0, 0)),       # b7
            ],
            out_specs=pl.BlockSpec((roi_tile, rep_pad), lambda i, k: (i, 0)),
            scratch_shapes=[pltpu.VMEM((roi_tile, rep_pad), jnp.float32)],
        ),
        compiler_params=pltpu.CompilerParams(
            dimension_semantics=("parallel", "arbitrary")),
    )(x_p, w6_p, b6_p, w7_p, b7_p)
    return out[:R, :rep]


# ----------------------------------------------------------------------------
# Full module forward
# ----------------------------------------------------------------------------
def fpn2mlp_feature_extractor(feats, rois, params, *, resolution,
                              spatial_scale):
    pooled = pooler(feats, rois, resolution=resolution,
                    spatial_scale=spatial_scale)            # (R, C, res, res)
    flat = pooled.reshape(pooled.shape[0], -1)              # x.view(N, -1)
    return mlp_head(flat, params["w6"], params["b6"],
                    params["w7"], params["b7"])


def init_params(key, in_channels, resolution, representation_size):
    d_in = in_channels * resolution * resolution
    k6w, k6b, k7w, k7b = jax.random.split(key, 4)
    # make_fc: nn.Linear-like init; synthetic deterministic init here, stored
    # as (in, out) so forward is x @ W + b.
    bound6 = (6.0 / (2.0 * d_in)) ** 0.5
    bound7 = (6.0 / (2.0 * representation_size)) ** 0.5
    return {
        "w6": jax.random.uniform(k6w, (d_in, representation_size),
                                 jnp.float32, -bound6, bound6),
        "b6": jax.random.uniform(k6b, (representation_size,),
                                 jnp.float32, -0.01, 0.01),
        "w7": jax.random.uniform(k7w, (representation_size, representation_size),
                                 jnp.float32, -bound7, bound7),
        "b7": jax.random.uniform(k7b, (representation_size,),
                                 jnp.float32, -0.01, 0.01),
    }


if __name__ == "__main__":
    # Small config consistent with the module:
    #   POOLER_RESOLUTION=4, POOLER_SCALES=(0.25,), MLP_HEAD_DIM=32, USE_GN=False
    in_channels = 4
    resolution = 4
    spatial_scale = 0.25
    representation_size = 32
    batch = 2
    H = W = 16  # feature map; image space is 64x64 at scale 0.25

    key = jax.random.PRNGKey(0)
    k_feat, k_box, k_param = jax.random.split(key, 3)

    feats = jax.random.normal(k_feat, (batch, in_channels, H, W), jnp.float32)

    # 10 proposals total across the 2 images: (batch_idx, x1, y1, x2, y2)
    n_rois = 10
    xy1 = jax.random.uniform(k_box, (n_rois, 2), jnp.float32, 0.0, 40.0)
    wh = jax.random.uniform(jax.random.fold_in(k_box, 1), (n_rois, 2),
                            jnp.float32, 4.0, 24.0)
    xy2 = jnp.clip(xy1 + wh, 0.0, 63.0)
    bidx = (jnp.arange(n_rois) % batch).astype(jnp.float32)[:, None]
    rois = jnp.concatenate([bidx, xy1, xy2], axis=1)

    params = init_params(k_param, in_channels, resolution, representation_size)

    out = fpn2mlp_feature_extractor(feats, rois, params,
                                    resolution=resolution,
                                    spatial_scale=spatial_scale)
    out = jax.block_until_ready(out)
    assert out.shape == (n_rois, representation_size)
    assert bool(jnp.all(out >= 0.0))  # ReLU output
    print("KERNEL_OK")
</pallas_src>

<mosaic_0001>
module attributes {stable_mosaic.version = 11 : i64} {
  func.func @_mlp_kernel(%arg0: i32, %arg1: i32, %arg2: memref<128x128xbf16, #tpu.memory_space<vmem>>, %arg3: memref<128x128xbf16, #tpu.memory_space<vmem>>, %arg4: memref<1x128xf32, #tpu.memory_space<vmem>>, %arg5: memref<128x128xbf16, #tpu.memory_space<vmem>>, %arg6: memref<1x128xf32, #tpu.memory_space<vmem>>, %arg7: memref<128x128xf32, #tpu.memory_space<vmem>>, %arg8: memref<128x128xf32, #tpu.memory_space<vmem>>) attributes {dimension_semantics = [#tpu.dimension_semantics<parallel>, #tpu.dimension_semantics<arbitrary>], iteration_bounds = array<i64: 1, 1>, scalar_prefetch = 0 : i64, scratch_operands = 1 : i64, tpu.core_type = #tpu.core_type<tc>, window_params = [{transform_indices = @transform_0, window_bounds = array<i64: 128, 128>}, {transform_indices = @transform_1, window_bounds = array<i64: 128, 128>}, {pipeline_mode = #tpu.pipeline_mode<synchronous>, transform_indices = @transform_2, window_bounds = array<i64: 1, 128>}, {pipeline_mode = #tpu.pipeline_mode<synchronous>, transform_indices = @transform_3, window_bounds = array<i64: 128, 128>}, {pipeline_mode = #tpu.pipeline_mode<synchronous>, transform_indices = @transform_4, window_bounds = array<i64: 1, 128>}, {transform_indices = @transform_5, window_bounds = array<i64: 128, 128>}]} {
    %c0_i32 = arith.constant 0 : i32
    %0 = arith.cmpi eq, %arg1, %c0_i32 : i32
    %1 = arith.extui %0 : i1 to i32
    %c0_i32_0 = arith.constant 0 : i32
    %2 = arith.cmpi ne, %1, %c0_i32_0 : i32
    scf.if %2 {
      %c0_10 = arith.constant 0 : index
      %c0_11 = arith.constant 0 : index
      %12 = vector.load %arg4[%c0_10, %c0_11] : memref<1x128xf32, #tpu.memory_space<vmem>>, vector<1x128xf32>
      %13 = vector.shape_cast %12 : vector<1x128xf32> to vector<1x128xf32>
      %14 = vector.broadcast %13 : vector<1x128xf32> to vector<128x128xf32>
      %c0_12 = arith.constant 0 : index
      %c0_13 = arith.constant 0 : index
      %15 = vector.load %arg8[%c0_12, %c0_13] : memref<128x128xf32, #tpu.memory_space<vmem>>, vector<128x128xf32>
      tpu.vector_store %arg8[%c0_12, %c0_13], %14 {strides = array<i32>} : memref<128x128xf32, #tpu.memory_space<vmem>>, vector<128x128xf32>,
    } else {
    }
    %c0 = arith.constant 0 : index
    %c0_1 = arith.constant 0 : index
    %3 = vector.load %arg8[%c0, %c0_1] : memref<128x128xf32, #tpu.memory_space<vmem>>, vector<128x128xf32>
    %c0_2 = arith.constant 0 : index
    %c0_3 = arith.constant 0 : index
    %4 = vector.load %arg2[%c0_2, %c0_3] : memref<128x128xbf16, #tpu.memory_space<vmem>>, vector<128x128xbf16>
    %c0_4 = arith.constant 0 : index
    %c0_5 = arith.constant 0 : index
    %5 = vector.load %arg3[%c0_4, %c0_5] : memref<128x128xbf16, #tpu.memory_space<vmem>>, vector<128x128xbf16>
    %cst = arith.constant dense<0.000000e+00> : vector<128x128xf32>
    %6 = tpu.matmul %4, %5, %cst {dimension_numbers = #tpu.dot_dimension_numbers<[1], [0], [0], [1], [0, 0, 1, 1], [], []>} : vector<128x128xbf16>, vector<128x128xbf16>, vector<128x128xf32> -> vector<128x128xf32>
    %7 = arith.addf %3, %6 : vector<128x128xf32>
    %c0_6 = arith.constant 0 : index
    %c0_7 = arith.constant 0 : index
    %8 = vector.load %arg8[%c0_6, %c0_7] : memref<128x128xf32, #tpu.memory_space<vmem>>, vector<128x128xf32>
    tpu.vector_store %arg8[%c0_6, %c0_7], %7 {strides = array<i32>} : memref<128x128xf32, #tpu.memory_space<vmem>>, vector<128x128xf32>,
    %c0_i32_8 = arith.constant 0 : i32
    %9 = arith.cmpi eq, %arg1, %c0_i32_8 : i32
    %10 = arith.extui %9 : i1 to i32
    %c0_i32_9 = arith.constant 0 : i32
    %11 = arith.cmpi ne, %10, %c0_i32_9 : i32
    scf.if %11 {
      %c0_10 = arith.constant 0 : index
      %c0_11 = arith.constant 0 : index
      %12 = vector.load %arg8[%c0_10, %c0_11] : memref<128x128xf32, #tpu.memory_space<vmem>>, vector<128x128xf32>
      %cst_12 = arith.constant 0.000000e+00 : f32
      %13 = vector.broadcast %cst_12 : f32 to vector<128x128xf32>
      %14 = arith.maximumf %12, %13 : vector<128x128xf32>
      %15 = arith.truncf %14 : vector<128x128xf32> to vector<128x128xbf16>
      %c0_13 = arith.constant 0 : index
      %c0_14 = arith.constant 0 : index
      %16 = vector.load %arg5[%c0_13, %c0_14] : memref<128x128xbf16, #tpu.memory_space<vmem>>, vector<128x128xbf16>
      %cst_15 = arith.constant dense<0.000000e+00> : vector<128x128xf32>
      %17 = tpu.matmul %15, %16, %cst_15 {dimension_numbers = #tpu.dot_dimension_numbers<[1], [0], [0], [1], [0, 0, 1, 1], [], []>} : vector<128x128xbf16>, vector<128x128xbf16>, vector<128x128xf32> -> vector<128x128xf32>
      %c0_16 = arith.constant 0 : index
      %c0_17 = arith.constant 0 : index
      %18 = vector.load %arg6[%c0_16, %c0_17] : memref<1x128xf32, #tpu.memory_space<vmem>>, vector<1x128xf32>
      %19 = vector.broadcast %18 : vector<1x128xf32> to vector<128x128xf32>
      %20 = arith.addf %17, %19 : vector<128x128xf32>
      %cst_18 = arith.constant 0.000000e+00 : f32
      %21 = vector.broadcast %cst_18 : f32 to vector<128x128xf32>
      %22 = arith.maximumf %20, %21 : vector<128x128xf32>
      %c0_19 = arith.constant 0 : index
      %c0_20 = arith.constant 0 : index
      %23 = vector.load %arg7[%c0_19, %c0_20] : memref<128x128xf32, #tpu.memory_space<vmem>>, vector<128x128xf32>
      tpu.vector_store %arg7[%c0_19, %c0_20], %22 {strides = array<i32>} : memref<128x128xf32, #tpu.memory_space<vmem>>, vector<128x128xf32>,
    } else {
    }
    return
  }
  func.func @transform_0(%arg0: i32, %arg1: i32) -> (i32, i32) {
    %c0_i32 = arith.constant 0 : i32
    return %arg0, %arg1 : i32, i32
  }
  func.func @transform_1(%arg0: i32, %arg1: i32) -> (i32, i32) {
    %c0_i32 = arith.constant 0 : i32
    %c0_i32_0 = arith.constant 0 : i32
    return %arg1, %c0_i32 : i32, i32
  }
  func.func @transform_2(%arg0: i32, %arg1: i32) -> (i32, i32) {
    %c0_i32 = arith.constant 0 : i32
    %c0_i32_0 = arith.constant 0 : i32
    %c0_i32_1 = arith.constant 0 : i32
    return %c0_i32, %c0_i32_0 : i32, i32
  }
  func.func @transform_3(%arg0: i32, %arg1: i32) -> (i32, i32) {
    %c0_i32 = arith.constant 0 : i32
    %c0_i32_0 = arith.constant 0 : i32
    %c0_i32_1 = arith.constant 0 : i32
    return %c0_i32, %c0_i32_0 : i32, i32
  }
  func.func @transform_4(%arg0: i32, %arg1: i32) -> (i32, i32) {
    %c0_i32 = arith.constant 0 : i32
    %c0_i32_0 = arith.constant 0 : i32
    %c0_i32_1 = arith.constant 0 : i32
    return %c0_i32, %c0_i32_0 : i32, i32
  }
  func.func @transform_5(%arg0: i32, %arg1: i32) -> (i32, i32) {
    %c0_i32 = arith.constant 0 : i32
    %c0_i32_0 = arith.constant 0 : i32
    return %arg0, %c0_i32 : i32, i32
  }
}

</mosaic_0001>

<llo_original>
// kernel: tpu_custom_call.1
$region0: #{tpu_custom_call.1}
  #allocation0 [shape = 'u32[]', space=smem, size = 0x4, offset = 0x4, fixed_abs, tag = 'smem constant byte address 0x4 - core index']
  #allocation1 [shape = 'u32[144,128]{1,0:T(1,128)}', space=vmem, size = 0x12000, scoped, tag = 'internal scratch']
  #allocation2 [shape = 'f32[128,128]{1,0:T(8,128)}', space=vmem, size = 0x10000, scoped, tag = 'scratch operand']
  %s0 = inlined_call_operand.hbm [shape: bf16[128,128], index: 0, kind: input, shape index: {}]
  %s1 = inlined_call_operand.hbm [shape: bf16[128,128], index: 1, kind: input, shape index: {}]
  %s2 = inlined_call_operand.vmem [shape: f32[1,128], index: 2, kind: input, shape index: {}]
  %s3 = inlined_call_operand.hbm [shape: bf16[128,128], index: 3, kind: input, shape index: {}]
  %s4 = inlined_call_operand.vmem [shape: f32[1,128], index: 4, kind: input, shape index: {}]
  %s5 = inlined_call_operand.hbm [shape: f32[128,128], index: 5, kind: output, shape index: {}]
  %s6 = sld [smem:[#allocation0]]
  $region50: #{tpu_custom_call.1} parent=0
    _
  %s8 = ssub.s32 1, %s6
  %s9 = scalar_select 0, %s8, %s6
  $region1: #{tpu_custom_call.1} parent=0
    #allocation3 [shape = 'u8[32768]{0}', space=vmem, size = 0x8000, scoped, tag = 'input window, operand 0, single buffered']
    #allocation4 [shape = 's32[1]{0}', space=sflag, size = 0x4, scoped, tag = 'scoped memory for tpu_custom_call.1']
    #allocation5 [shape = 's32[1]{0}', space=sflag, size = 0x4, scoped, tag = 'scoped memory for tpu_custom_call.1']
    #allocation6 [shape = 'u8[32768]{0}', space=vmem, size = 0x8000, scoped, tag = 'input window, operand 1, single buffered']
    #allocation7 [shape = 's32[1]{0}', space=sflag, size = 0x4, scoped, tag = 'scoped memory for tpu_custom_call.1']
    #allocation8 [shape = 'u8[32768]{0}', space=vmem, size = 0x8000, scoped, tag = 'input window, operand 3, single buffered']
    #allocation9 [shape = 'u8[65536]{0}', space=vmem, size = 0x10000, scoped, tag = 'output window, operand 0, single buffered']
    %10 = vsyncpa [#allocation4], 0
    %11 = vsyncpa [#allocation7], 0
    %12 = vsyncpa [#allocation5], 0
    // Predicated region
    $region2: #{tpu_custom_call.1} parent=1 // pred_check
      _
    $region3: #{tpu_custom_call.1} parent=1 // pred_check_branch
      %14 = sbr.rel (0) target = $region5
    $region4: #{tpu_custom_call.1} parent=1 // pred_region
      %s16 = ssub.s32 1024, 1024
      %17 = vsyncadd [#allocation4], %s16
      %s18 = sshll.u32 [#allocation3], 4
      %s19 = int_to_ptr.vmem [resolvable:$true] %s18
      %24 = dma.hbm_to_vmem [thread:$0]  %s0, 1024, %s19, [#allocation4], 64, 64, 4
    $region5: #{tpu_custom_call.1} parent=1 // pred_fallthru
      _
    // Predicated region
    $region6: #{tpu_custom_call.1} parent=1 // pred_check
      _
    $region7: #{tpu_custom_call.1} parent=1 // pred_check_branch
      %26 = sbr.rel (0) target = $region9
    $region8: #{tpu_custom_call.1} parent=1 // pred_region
      %s28 = ssub.s32 1024, 1024
      %29 = vsyncadd [#allocation7], %s28
      %s30 = sshll.u32 [#allocation6], 4
      %s31 = int_to_ptr.vmem [resolvable:$true] %s30
      %36 = dma.hbm_to_vmem [thread:$0]  %s1, 1024, %s31, [#allocation7], 64, 64, 4
    $region9: #{tpu_custom_call.1} parent=1 // pred_fallthru
      _
    // Predicated region
    $region10: #{tpu_custom_call.1} parent=1 // pred_check
      _
    $region11: #{tpu_custom_call.1} parent=1 // pred_check_branch
      %38 = sbr.rel (0) target = $region13
    $region12: #{tpu_custom_call.1} parent=1 // pred_region
      _
    $region13: #{tpu_custom_call.1} parent=1 // pred_fallthru
      _
    // Predicated region
    $region14: #{tpu_custom_call.1} parent=1 // pred_check
      _
    $region15: #{tpu_custom_call.1} parent=1 // pred_check_branch
      %40 = sbr.rel (0) target = $region17
    $region16: #{tpu_custom_call.1} parent=1 // pred_region
      %s42 = ssub.s32 1024, 1024
      %43 = vsyncadd [#allocation7], %s42
      %s44 = sshll.u32 [#allocation8], 4
      %s45 = int_to_ptr.vmem [resolvable:$true] %s44
      %50 = dma.hbm_to_vmem [thread:$0]  %s3, 1024, %s45, [#allocation7], 64, 64, 4
    $region17: #{tpu_custom_call.1} parent=1 // pred_fallthru
      _
    // Predicated region
    $region18: #{tpu_custom_call.1} parent=1 // pred_check
      _
    $region19: #{tpu_custom_call.1} parent=1 // pred_check_branch
      %52 = sbr.rel (0) target = $region21
    $region20: #{tpu_custom_call.1} parent=1 // pred_region
      _
    $region21: #{tpu_custom_call.1} parent=1 // pred_fallthru
      _
    // Predicated region
    $region22: #{tpu_custom_call.1} parent=1 // pred_check
      _
    $region23: #{tpu_custom_call.1} parent=1 // pred_check_branch
      %54 = sbr.rel (0) target = $region25
    $region24: #{tpu_custom_call.1} parent=1 // pred_region
      %55 = dma.done [#allocation4], 1024
    $region25: #{tpu_custom_call.1} parent=1 // pred_fallthru
      _
    // Predicated region
    $region26: #{tpu_custom_call.1} parent=1 // pred_check
      _
    $region27: #{tpu_custom_call.1} parent=1 // pred_check_branch
      %57 = sbr.rel (0) target = $region29
    $region28: #{tpu_custom_call.1} parent=1 // pred_region
      %58 = dma.done [#allocation7], 1024
    $region29: #{tpu_custom_call.1} parent=1 // pred_fallthru
      _
    // Predicated region
    $region30: #{tpu_custom_call.1} parent=1 // pred_check
      _
    $region31: #{tpu_custom_call.1} parent=1 // pred_check_branch
      %60 = sbr.rel (0) target = $region33
    $region32: #{tpu_custom_call.1} parent=1 // pred_region
      %61 = dma.done [#allocation7], 1024
    $region33: #{tpu_custom_call.1} parent=1 // pred_fallthru
      _
    %p63 = scmp.eq.s32.totalorder 0, 0
    // Predicated region
    $region34: #{tpu_custom_call.1} parent=1 // pred_check
      %p64 = pneg %p63
    $region35: #{tpu_custom_call.1} parent=1 // pred_check_branch
      %66 = sbr.rel (%p64) target = $region37
    $region36: #{tpu_custom_call.1} parent=1 // pred_region
      %v67 = vld [vmem:[%s2] sm:$0x1]
      %v69 = vlaneseq
      %v70 = vshrl.u32 %v69, 7
      %v71 = vsub.s32 0, %v70
      %v72 = vrot.slane %v67, %v71
      %74 = vst [vmem:[#allocation2] sm:$0xff] %v72
      %75 = vst [vmem:[#allocation2 + $0x8] sm:$0xff] %v72
      %76 = vst [vmem:[#allocation2 + $0x10] sm:$0xff] %v72
      %77 = vst [vmem:[#allocation2 + $0x18] sm:$0xff] %v72
      %78 = vst [vmem:[#allocation2 + $0x20] sm:$0xff] %v72
      %79 = vst [vmem:[#allocation2 + $0x28] sm:$0xff] %v72
      %80 = vst [vmem:[#allocation2 + $0x30] sm:$0xff] %v72
      %81 = vst [vmem:[#allocation2 + $0x38] sm:$0xff] %v72
      %82 = vst [vmem:[#allocation2 + $0x40] sm:$0xff] %v72
      %83 = vst [vmem:[#allocation2 + $0x48] sm:$0xff] %v72
      %84 = vst [vmem:[#allocation2 + $0x50] sm:$0xff] %v72
      %85 = vst [vmem:[#allocation2 + $0x58] sm:$0xff] %v72
      %86 = vst [vmem:[#allocation2 + $0x60] sm:$0xff] %v72
      %87 = vst [vmem:[#allocation2 + $0x68] sm:$0xff] %v72
      %88 = vst [vmem:[#allocation2 + $0x70] sm:$0xff] %v72
      %89 = vst [vmem:[#allocation2 + $0x78] sm:$0xff] %v72
    $region37: #{tpu_custom_call.1} parent=1 // pred_fallthru
      _
    %v90 = vld [vmem:[#allocation2] sm:$0xff]
    %v91 = vld [vmem:[#allocation2 + $0x8] sm:$0xff]
    %v92 = vld [vmem:[#allocation2 + $0x10] sm:$0xff]
    %v93 = vld [vmem:[#allocation2 + $0x18] sm:$0xff]
    %v94 = vld [vmem:[#allocation2 + $0x20] sm:$0xff]
    %v95 = vld [vmem:[#allocation2 + $0x28] sm:$0xff]
    %v96 = vld [vmem:[#allocation2 + $0x30] sm:$0xff]
    %v97 = vld [vmem:[#allocation2 + $0x38] sm:$0xff]
    %v98 = vld [vmem:[#allocation2 + $0x40] sm:$0xff]
    %v99 = vld [vmem:[#allocation2 + $0x48] sm:$0xff]
    %v100 = vld [vmem:[#allocation2 + $0x50] sm:$0xff]
    %v101 = vld [vmem:[#allocation2 + $0x58] sm:$0xff]
    %v102 = vld [vmem:[#allocation2 + $0x60] sm:$0xff]
    %v103 = vld [vmem:[#allocation2 + $0x68] sm:$0xff]
    %v104 = vld [vmem:[#allocation2 + $0x70] sm:$0xff]
    %v105 = vld [vmem:[#allocation2 + $0x78] sm:$0xff]
    %v106 = vld [vmem:[#allocation3] sm:$0xf]
    %v107 = vld [vmem:[#allocation3 + $0x4] sm:$0xf]
    %v108 = vld [vmem:[#allocation3 + $0x8] sm:$0xf]
    %v109 = vld [vmem:[#allocation3 + $0xc] sm:$0xf]
    %v110 = vld [vmem:[#allocation3 + $0x10] sm:$0xf]
    %v111 = vld [vmem:[#allocation3 + $0x14] sm:$0xf]
    %v112 = vld [vmem:[#allocation3 + $0x18] sm:$0xf]
    %v113 = vld [vmem:[#allocation3 + $0x1c] sm:$0xf]
    %v114 = vld [vmem:[#allocation3 + $0x20] sm:$0xf]
    %v115 = vld [vmem:[#allocation3 + $0x24] sm:$0xf]
    %v116 = vld [vmem:[#allocation3 + $0x28] sm:$0xf]
    %v117 = vld [vmem:[#allocation3 + $0x2c] sm:$0xf]
    %v118 = vld [vmem:[#allocation3 + $0x30] sm:$0xf]
    %v119 = vld [vmem:[#allocation3 + $0x34] sm:$0xf]
    %v120 = vld [vmem:[#allocation3 + $0x38] sm:$0xf]
    %v121 = vld [vmem:[#allocation3 + $0x3c] sm:$0xf]
    %v122 = vld [vmem:[#allocation6] sm:$0xf]
    %v123 = vld [vmem:[#allocation6 + $0x4] sm:$0xf]
    %v124 = vld [vmem:[#allocation6 + $0x8] sm:$0xf]
    %v125 = vld [vmem:[#allocation6 + $0xc] sm:$0xf]
    %v126 = vld [vmem:[#allocation6 + $0x10] sm:$0xf]
    %v127 = vld [vmem:[#allocation6 + $0x14] sm:$0xf]
    %v128 = vld [vmem:[#allocation6 + $0x18] sm:$0xf]
    %v129 = vld [vmem:[#allocation6 + $0x1c] sm:$0xf]
    %v130 = vld [vmem:[#allocation6 + $0x20] sm:$0xf]
    %v131 = vld [vmem:[#allocation6 + $0x24] sm:$0xf]
    %v132 = vld [vmem:[#allocation6 + $0x28] sm:$0xf]
    %v133 = vld [vmem:[#allocation6 + $0x2c] sm:$0xf]
    %v134 = vld [vmem:[#allocation6 + $0x30] sm:$0xf]
    %v135 = vld [vmem:[#allocation6 + $0x34] sm:$0xf]
    %v136 = vld [vmem:[#allocation6 + $0x38] sm:$0xf]
    %v137 = vld [vmem:[#allocation6 + $0x3c] sm:$0xf]
    %v154 = vunpack.c.l.b16 %v106
    %v155 = vunpack.c.l.b16 %v107
    %v156 = vunpack.c.l.b16 %v108
    %v157 = vunpack.c.l.b16 %v109
    %v158 = vunpack.c.l.b16 %v110
    %v159 = vunpack.c.l.b16 %v111
    %v160 = vunpack.c.l.b16 %v112
    %v161 = vunpack.c.l.b16 %v113
    %v162 = vunpack.c.l.b16 %v114
    %v163 = vunpack.c.l.b16 %v115
    %v164 = vunpack.c.l.b16 %v116
    %v165 = vunpack.c.l.b16 %v117
    %v166 = vunpack.c.l.b16 %v118
    %v167 = vunpack.c.l.b16 %v119
    %v168 = vunpack.c.l.b16 %v120
    %v169 = vunpack.c.l.b16 %v121
    %v170 = vpack.c.b16 %v155, %v154
    %v171 = vpack.c.b16 %v157, %v156
    %v172 = vpack.c.b16 %v159, %v158
    %v173 = vpack.c.b16 %v161, %v160
    %v174 = vpack.c.b16 %v163, %v162
    %v175 = vpack.c.b16 %v165, %v164
    %v176 = vpack.c.b16 %v167, %v166
    %v177 = vpack.c.b16 %v169, %v168
    %v202 = vunpack.c.l.b16 %v122
    %v203 = vunpack.c.l.b16 %v123
    %v204 = vunpack.c.l.b16 %v124
    %v205 = vunpack.c.l.b16 %v125
    %v206 = vunpack.c.l.b16 %v126
    %v207 = vunpack.c.l.b16 %v127
    %v208 = vunpack.c.l.b16 %v128
    %v209 = vunpack.c.l.b16 %v129
    %v210 = vunpack.c.l.b16 %v130
    %v211 = vunpack.c.l.b16 %v131
    %v212 = vunpack.c.l.b16 %v132
    %v213 = vunpack.c.l.b16 %v133
    %v214 = vunpack.c.l.b16 %v134
    %v215 = vunpack.c.l.b16 %v135
    %v216 = vunpack.c.l.b16 %v136
    %v217 = vunpack.c.l.b16 %v137
    %v218 = vpack.c.b16 %v203, %v202
    %v219 = vpack.c.b16 %v205, %v204
    %v220 = vpack.c.b16 %v207, %v206
    %v221 = vpack.c.b16 %v209, %v208
    %v222 = vpack.c.b16 %v211, %v210
    %v223 = vpack.c.b16 %v213, %v212
    %v224 = vpack.c.b16 %v215, %v214
    %v225 = vpack.c.b16 %v217, %v216
    %234 = vmatprep.subr.bf16.mxu0 0
    %235 = vmatpush1.bf16.msra.mxu0 %v218
    %236 = vmatprep.subr.bf16.mxu0 0
    %237 = vmatpush1.bf16.msra.mxu0 %v219
    %238 = vmatprep.subr.bf16.mxu0 0
    %239 = vmatpush1.bf16.msra.mxu0 %v220
    %240 = vmatprep.subr.bf16.mxu0 0
    %241 = vmatpush1.bf16.msra.mxu0 %v221
    %242 = vmatprep.subr.bf16.mxu0 0
    %243 = vmatpush1.bf16.msra.mxu0 %v222
    %244 = vmatprep.subr.bf16.mxu0 0
    %245 = vmatpush1.bf16.msra.mxu0 %v223
    %246 = vmatprep.subr.bf16.mxu0 0
    %247 = vmatpush1.bf16.msra.mxu0 %v224
    %248 = vmatprep.subr.bf16.mxu0 0
    %249 = vmatpush1.bf16.msra.mxu0 %v225
    %250 = vmatprep.subr.bf16.mxu0 0
    %251 = vmatpush1.bf16.msra.mxu0 0
    %252 = vmatprep.subr.bf16.mxu0 0
    %253 = vmatpush1.bf16.msra.mxu0 0
    %254 = vmatprep.subr.bf16.mxu0 0
    %255 = vmatpush1.bf16.msra.mxu0 0
    %256 = vmatprep.subr.bf16.mxu0 0
    %257 = vmatpush1.bf16.msra.mxu0 0
    %258 = vmatprep.subr.bf16.mxu0 0
    %259 = vmatpush1.bf16.msra.mxu0 0
    %260 = vmatprep.subr.bf16.mxu0 0
    %261 = vmatpush1.bf16.msra.mxu0 0
    %262 = vmatprep.subr.bf16.mxu0 0
    %263 = vmatpush1.bf16.msra.mxu0 0
    %264 = vmatprep.subr.bf16.mxu0 0
    %265 = vmatpush1.bf16.msra.mxu0 0
    %266 = vmatprep.mubr.bf16.mxu0 0
    %267 = vmatmul.mubr.bf16.gmra.mrb[0].mxu0 %v170
    %v268 = vpop.f32.mrb[0].mxu0
    %v269 = vadd.f32 0.0, %v268
    %v270 = vpop.f32.mrb[0].mxu0
    %v271 = vpop.f32.mrb[0].mxu0
    %v272 = vadd.f32 0.0, %v271
    %v273 = vpop.f32.mrb[0].mxu0
    %274 = vmatprep.mubr.bf16.mxu0 0
    %275 = vmatmul.mubr.bf16.gmra.mrb[0].mxu0 %v171
    %v276 = vpop.f32.mrb[0].mxu0
    %v277 = vadd.f32 0.0, %v276
    %v278 = vpop.f32.mrb[0].mxu0
    %v279 = vpop.f32.mrb[0].mxu0
    %v280 = vadd.f32 0.0, %v279
    %v281 = vpop.f32.mrb[0].mxu0
    %282 = vmatprep.mubr.bf16.mxu0 0
    %283 = vmatmul.mubr.bf16.gmra.mrb[0].mxu0 %v172
    %v284 = vpop.f32.mrb[0].mxu0
    %v285 = vadd.f32 0.0, %v284
    %v286 = vpop.f32.mrb[0].mxu0
    %v287 = vpop.f32.mrb[0].mxu0
    %v288 = vadd.f32 0.0, %v287
    %v289 = vpop.f32.mrb[0].mxu0
    %290 = vmatprep.mubr.bf16.mxu0 0
    %291 = vmatmul.mubr.bf16.gmra.mrb[0].mxu0 %v173
    %v292 = vpop.f32.mrb[0].mxu0
    %v293 = vadd.f32 0.0, %v292
    %v294 = vpop.f32.mrb[0].mxu0
    %v295 = vpop.f32.mrb[0].mxu0
    %v296 = vadd.f32 0.0, %v295
    %v297 = vpop.f32.mrb[0].mxu0
    %298 = vmatprep.mubr.bf16.mxu0 0
    %299 = vmatmul.mubr.bf16.gmra.mrb[0].mxu0 %v174
    %v300 = vpop.f32.mrb[0].mxu0
    %v301 = vadd.f32 0.0, %v300
    %v302 = vpop.f32.mrb[0].mxu0
    %v303 = vpop.f32.mrb[0].mxu0
    %v304 = vadd.f32 0.0, %v303
    %v305 = vpop.f32.mrb[0].mxu0
    %306 = vmatprep.mubr.bf16.mxu0 0
    %307 = vmatmul.mubr.bf16.gmra.mrb[0].mxu0 %v175
    %v308 = vpop.f32.mrb[0].mxu0
    %v309 = vadd.f32 0.0, %v308
    %v310 = vpop.f32.mrb[0].mxu0
    %v311 = vpop.f32.mrb[0].mxu0
    %v312 = vadd.f32 0.0, %v311
    %v313 = vpop.f32.mrb[0].mxu0
    %314 = vmatprep.mubr.bf16.mxu0 0
    %315 = vmatmul.mubr.bf16.gmra.mrb[0].mxu0 %v176
    %v316 = vpop.f32.mrb[0].mxu0
    %v317 = vadd.f32 0.0, %v316
    %v318 = vpop.f32.mrb[0].mxu0
    %v319 = vpop.f32.mrb[0].mxu0
    %v320 = vadd.f32 0.0, %v319
    %v321 = vpop.f32.mrb[0].mxu0
    %322 = vmatprep.mubr.bf16.mxu0 0
    %323 = vmatmul.mubr.bf16.gmra.mrb[0].mxu0 %v177
    %v324 = vpop.f32.mrb[0].mxu0
    %v325 = vadd.f32 0.0, %v324
    %v326 = vpop.f32.mrb[0].mxu0
    %v327 = vpop.f32.mrb[0].mxu0
    %v328 = vadd.f32 0.0, %v327
    %v329 = vpop.f32.mrb[0].mxu0
    %330 = vdwg.mxu0
    %v331 = vadd.f32 %v90, %v269
    %v332 = vadd.f32 %v91, %v272
    %v333 = vadd.f32 %v92, %v277
    %v334 = vadd.f32 %v93, %v280
    %v335 = vadd.f32 %v94, %v285
    %v336 = vadd.f32 %v95, %v288
    %v337 = vadd.f32 %v96, %v293
    %v338 = vadd.f32 %v97, %v296
    %v339 = vadd.f32 %v98, %v301
    %v340 = vadd.f32 %v99, %v304
    %v341 = vadd.f32 %v100, %v309
    %v342 = vadd.f32 %v101, %v312
    %v343 = vadd.f32 %v102, %v317
    %v344 = vadd.f32 %v103, %v320
    %v345 = vadd.f32 %v104, %v325
    %v346 = vadd.f32 %v105, %v328
    %347 = vst [vmem:[#allocation2] sm:$0xff] %v331
    %348 = vst [vmem:[#allocation2 + $0x8] sm:$0xff] %v332
    %349 = vst [vmem:[#allocation2 + $0x10] sm:$0xff] %v333
    %350 = vst [vmem:[#allocation2 + $0x18] sm:$0xff] %v334
    %351 = vst [vmem:[#allocation2 + $0x20] sm:$0xff] %v335
    %352 = vst [vmem:[#allocation2 + $0x28] sm:$0xff] %v336
    %353 = vst [vmem:[#allocation2 + $0x30] sm:$0xff] %v337
    %354 = vst [vmem:[#allocation2 + $0x38] sm:$0xff] %v338
    %355 = vst [vmem:[#allocation2 + $0x40] sm:$0xff] %v339
    %356 = vst [vmem:[#allocation2 + $0x48] sm:$0xff] %v340
    %357 = vst [vmem:[#allocation2 + $0x50] sm:$0xff] %v341
    %358 = vst [vmem:[#allocation2 + $0x58] sm:$0xff] %v342
    %359 = vst [vmem:[#allocation2 + $0x60] sm:$0xff] %v343
    %360 = vst [vmem:[#allocation2 + $0x68] sm:$0xff] %v344
    %361 = vst [vmem:[#allocation2 + $0x70] sm:$0xff] %v345
    %362 = vst [vmem:[#allocation2 + $0x78] sm:$0xff] %v346
    // Predicated region
    $region38: #{tpu_custom_call.1} parent=1 // pred_check
      %p363 = pneg %p63
    $region39: #{tpu_custom_call.1} parent=1 // pred_check_branch
      %365 = sbr.rel (%p363) target = $region41
    $region40: #{tpu_custom_call.1} parent=1 // pred_region
      %v366 = vld [vmem:[#allocation2] sm:$0xff]
      %v367 = vld [vmem:[#allocation2 + $0x8] sm:$0xff]
      %v368 = vld [vmem:[#allocation2 + $0x10] sm:$0xff]
      %v369 = vld [vmem:[#allocation2 + $0x18] sm:$0xff]
      %v370 = vld [vmem:[#allocation2 + $0x20] sm:$0xff]
      %v371 = vld [vmem:[#allocation2 + $0x28] sm:$0xff]
      %v372 = vld [vmem:[#allocation2 + $0x30] sm:$0xff]
      %v373 = vld [vmem:[#allocation2 + $0x38] sm:$0xff]
      %v374 = vld [vmem:[#allocation2 + $0x40] sm:$0xff]
      %v375 = vld [vmem:[#allocation2 + $0x48] sm:$0xff]
      %v376 = vld [vmem:[#allocation2 + $0x50] sm:$0xff]
      %v377 = vld [vmem:[#allocation2 + $0x58] sm:$0xff]
      %v378 = vld [vmem:[#allocation2 + $0x60] sm:$0xff]
      %v379 = vld [vmem:[#allocation2 + $0x68] sm:$0xff]
      %v380 = vld [vmem:[#allocation2 + $0x70] sm:$0xff]
      %v381 = vld [vmem:[#allocation2 + $0x78] sm:$0xff]
      %v382 = vmax.f32 %v366, 0.0
      %v383 = vmax.f32 %v367, 0.0
      %v384 = vmax.f32 %v368, 0.0
      %v385 = vmax.f32 %v369, 0.0
      %v386 = vmax.f32 %v370, 0.0
      %v387 = vmax.f32 %v371, 0.0
      %v388 = vmax.f32 %v372, 0.0
      %v389 = vmax.f32 %v373, 0.0
      %v390 = vmax.f32 %v374, 0.0
      %v391 = vmax.f32 %v375, 0.0
      %v392 = vmax.f32 %v376, 0.0
      %v393 = vmax.f32 %v377, 0.0
      %v394 = vmax.f32 %v378, 0.0
      %v395 = vmax.f32 %v379, 0.0
      %v396 = vmax.f32 %v380, 0.0
      %v397 = vmax.f32 %v381, 0.0
      %v398 = vpack.c.bf16 %v383, %v382
      %v399 = vpack.c.bf16 %v385, %v384
      %v400 = vpack.c.bf16 %v387, %v386
      %v401 = vpack.c.bf16 %v389, %v388
      %v402 = vpack.c.bf16 %v391, %v390
      %v403 = vpack.c.bf16 %v393, %v392
      %v404 = vpack.c.bf16 %v395, %v394
      %v405 = vpack.c.bf16 %v397, %v396
      %v406 = vld [vmem:[#allocation8] sm:$0xf]
      %v407 = vld [vmem:[#allocation8 + $0x4] sm:$0xf]
      %v408 = vld [vmem:[#allocation8 + $0x8] sm:$0xf]
      %v409 = vld [vmem:[#allocation8 + $0xc] sm:$0xf]
      %v410 = vld [vmem:[#allocation8 + $0x10] sm:$0xf]
      %v411 = vld [vmem:[#allocation8 + $0x14] sm:$0xf]
      %v412 = vld [vmem:[#allocation8 + $0x18] sm:$0xf]
      %v413 = vld [vmem:[#allocation8 + $0x1c] sm:$0xf]
      %v414 = vld [vmem:[#allocation8 + $0x20] sm:$0xf]
      %v415 = vld [vmem:[#allocation8 + $0x24] sm:$0xf]
      %v416 = vld [vmem:[#allocation8 + $0x28] sm:$0xf]
      %v417 = vld [vmem:[#allocation8 + $0x2c] sm:$0xf]
      %v418 = vld [vmem:[#allocation8 + $0x30] sm:$0xf]
      %v419 = vld [vmem:[#allocation8 + $0x34] sm:$0xf]
      %v420 = vld [vmem:[#allocation8 + $0x38] sm:$0xf]
      %v421 = vld [vmem:[#allocation8 + $0x3c] sm:$0xf]
      %v422 = vld [vmem:[%s4] sm:$0x1]
      %v424 = vlaneseq
      %v425 = vshrl.u32 %v424, 7
      %v426 = vsub.s32 0, %v425
      %v427 = vrot.slane %v422, %v426
      %v445 = vunpack.c.l.b16 %v406
      %v446 = vunpack.c.l.b16 %v407
      %v447 = vunpack.c.l.b16 %v408
      %v448 = vunpack.c.l.b16 %v409
      %v449 = vunpack.c.l.b16 %v410
      %v450 = vunpack.c.l.b16 %v411
      %v451 = vunpack.c.l.b16 %v412
      %v452 = vunpack.c.l.b16 %v413
      %v453 = vunpack.c.l.b16 %v414
      %v454 = vunpack.c.l.b16 %v415
      %v455 = vunpack.c.l.b16 %v416
      %v456 = vunpack.c.l.b16 %v417
      %v457 = vunpack.c.l.b16 %v418
      %v458 = vunpack.c.l.b16 %v419
      %v459 = vunpack.c.l.b16 %v420
      %v460 = vunpack.c.l.b16 %v421
      %v461 = vpack.c.b16 %v446, %v445
      %v462 = vpack.c.b16 %v448, %v447
      %v463 = vpack.c.b16 %v450, %v449
      %v464 = vpack.c.b16 %v452, %v451
      %v465 = vpack.c.b16 %v454, %v453
      %v466 = vpack.c.b16 %v456, %v455
      %v467 = vpack.c.b16 %v458, %v457
      %v468 = vpack.c.b16 %v460, %v459
      %477 = vmatprep.subr.bf16.mxu0 0
      %478 = vmatpush1.bf16.msra.mxu0 %v461
      %479 = vmatprep.subr.bf16.mxu0 0
      %480 = vmatpush1.bf16.msra.mxu0 %v462
      %481 = vmatprep.subr.bf16.mxu0 0
      %482 = vmatpush1.bf16.msra.mxu0 %v463
      %483 = vmatprep.subr.bf16.mxu0 0
      %484 = vmatpush1.bf16.msra.mxu0 %v464
      %485 = vmatprep.subr.bf16.mxu0 0
      %486 = vmatpush1.bf16.msra.mxu0 %v465
      %487 = vmatprep.subr.bf16.mxu0 0
      %488 = vmatpush1.bf16.msra.mxu0 %v466
      %489 = vmatprep.subr.bf16.mxu0 0
      %490 = vmatpush1.bf16.msra.mxu0 %v467
      %491 = vmatprep.subr.bf16.mxu0 0
      %492 = vmatpush1.bf16.msra.mxu0 %v468
      %493 = vmatprep.subr.bf16.mxu0 0
      %494 = vmatpush1.bf16.msra.mxu0 0
      %495 = vmatprep.subr.bf16.mxu0 0
      %496 = vmatpush1.bf16.msra.mxu0 0
      %497 = vmatprep.subr.bf16.mxu0 0
      %498 = vmatpush1.bf16.msra.mxu0 0
      %499 = vmatprep.subr.bf16.mxu0 0
      %500 = vmatpush1.bf16.msra.mxu0 0
      %501 = vmatprep.subr.bf16.mxu0 0
      %502 = vmatpush1.bf16.msra.mxu0 0
      %503 = vmatprep.subr.bf16.mxu0 0
      %504 = vmatpush1.bf16.msra.mxu0 0
      %505 = vmatprep.subr.bf16.mxu0 0
      %506 = vmatpush1.bf16.msra.mxu0 0
      %507 = vmatprep.subr.bf16.mxu0 0
      %508 = vmatpush1.bf16.msra.mxu0 0
      %509 = vmatprep.mubr.bf16.mxu0 0
      %510 = vmatmul.mubr.bf16.gmra.mrb[0].mxu0 %v398
      %v511 = vpop.f32.mrb[0].mxu0
      %v512 = vadd.f32 %v427, %v511
      %v513 = vpop.f32.mrb[0].mxu0
      %v514 = vpop.f32.mrb[0].mxu0
      %v515 = vadd.f32 %v427, %v514
      %v516 = vpop.f32.mrb[0].mxu0
      %517 = vmatprep.mubr.bf16.mxu0 0
      %518 = vmatmul.mubr.bf16.gmra.mrb[0].mxu0 %v399
      %v519 = vpop.f32.mrb[0].mxu0
      %v520 = vadd.f32 %v427, %v519
      %v521 = vpop.f32.mrb[0].mxu0
      %v522 = vpop.f32.mrb[0].mxu0
      %v523 = vadd.f32 %v427, %v522
      %v524 = vpop.f32.mrb[0].mxu0
      %525 = vmatprep.mubr.bf16.mxu0 0
      %526 = vmatmul.mubr.bf16.gmra.mrb[0].mxu0 %v400
      %v527 = vpop.f32.mrb[0].mxu0
      %v528 = vadd.f32 %v427, %v527
      %v529 = vpop.f32.mrb[0].mxu0
      %v530 = vpop.f32.mrb[0].mxu0
      %v531 = vadd.f32 %v427, %v530
      %v532 = vpop.f32.mrb[0].mxu0
      %533 = vmatprep.mubr.bf16.mxu0 0
      %534 = vmatmul.mubr.bf16.gmra.mrb[0].mxu0 %v401
      %v535 = vpop.f32.mrb[0].mxu0
      %v536 = vadd.f32 %v427, %v535
      %v537 = vpop.f32.mrb[0].mxu0
      %v538 = vpop.f32.mrb[0].mxu0
      %v539 = vadd.f32 %v427, %v538
      %v540 = vpop.f32.mrb[0].mxu0
      %541 = vmatprep.mubr.bf16.mxu0 0
      %542 = vmatmul.mubr.bf16.gmra.mrb[0].mxu0 %v402
      %v543 = vpop.f32.mrb[0].mxu0
      %v544 = vadd.f32 %v427, %v543
      %v545 = vpop.f32.mrb[0].mxu0
      %v546 = vpop.f32.mrb[0].mxu0
      %v547 = vadd.f32 %v427, %v546
      %v548 = vpop.f32.mrb[0].mxu0
      %549 = vmatprep.mubr.bf16.mxu0 0
      %550 = vmatmul.mubr.bf16.gmra.mrb[0].mxu0 %v403
      %v551 = vpop.f32.mrb[0].mxu0
      %v552 = vadd.f32 %v427, %v551
      %v553 = vpop.f32.mrb[0].mxu0
      %v554 = vpop.f32.mrb[0].mxu0
      %v555 = vadd.f32 %v427, %v554
      %v556 = vpop.f32.mrb[0].mxu0
      %557 = vmatprep.mubr.bf16.mxu0 0
      %558 = vmatmul.mubr.bf16.gmra.mrb[0].mxu0 %v404
      %v559 = vpop.f32.mrb[0].mxu0
      %v560 = vadd.f32 %v427, %v559
      %v561 = vpop.f32.mrb[0].mxu0
      %v562 = vpop.f32.mrb[0].mxu0
      %v563 = vadd.f32 %v427, %v562
      %v564 = vpop.f32.mrb[0].mxu0
      %565 = vmatprep.mubr.bf16.mxu0 0
      %566 = vmatmul.mubr.bf16.gmra.mrb[0].mxu0 %v405
      %v567 = vpop.f32.mrb[0].mxu0
      %v568 = vadd.f32 %v427, %v567
      %v569 = vpop.f32.mrb[0].mxu0
      %v570 = vpop.f32.mrb[0].mxu0
      %v571 = vadd.f32 %v427, %v570
      %v572 = vpop.f32.mrb[0].mxu0
      %573 = vdwg.mxu0
      %v574 = vmax.f32 %v512, 0.0
      %v575 = vmax.f32 %v515, 0.0
      %v576 = vmax.f32 %v520, 0.0
      %v577 = vmax.f32 %v523, 0.0
      %v578 = vmax.f32 %v528, 0.0
      %v579 = vmax.f32 %v531, 0.0
      %v580 = vmax.f32 %v536, 0.0
      %v581 = vmax.f32 %v539, 0.0
      %v582 = vmax.f32 %v544, 0.0
      %v583 = vmax.f32 %v547, 0.0
      %v584 = vmax.f32 %v552, 0.0
      %v585 = vmax.f32 %v555, 0.0
      %v586 = vmax.f32 %v560, 0.0
      %v587 = vmax.f32 %v563, 0.0
      %v588 = vmax.f32 %v568, 0.0
      %v589 = vmax.f32 %v571, 0.0
      %590 = vst [vmem:[#allocation9] sm:$0xff] %v574
      %591 = vst [vmem:[#allocation9 + $0x8] sm:$0xff] %v575
      %592 = vst [vmem:[#allocation9 + $0x10] sm:$0xff] %v576
      %593 = vst [vmem:[#allocation9 + $0x18] sm:$0xff] %v577
      %594 = vst [vmem:[#allocation9 + $0x20] sm:$0xff] %v578
      %595 = vst [vmem:[#allocation9 + $0x28] sm:$0xff] %v579
      %596 = vst [vmem:[#allocation9 + $0x30] sm:$0xff] %v580
      %597 = vst [vmem:[#allocation9 + $0x38] sm:$0xff] %v581
      %598 = vst [vmem:[#allocation9 + $0x40] sm:$0xff] %v582
      %599 = vst [vmem:[#allocation9 + $0x48] sm:$0xff] %v583
      %600 = vst [vmem:[#allocation9 + $0x50] sm:$0xff] %v584
      %601 = vst [vmem:[#allocation9 + $0x58] sm:$0xff] %v585
      %602 = vst [vmem:[#allocation9 + $0x60] sm:$0xff] %v586
      %603 = vst [vmem:[#allocation9 + $0x68] sm:$0xff] %v587
      %604 = vst [vmem:[#allocation9 + $0x70] sm:$0xff] %v588
      %605 = vst [vmem:[#allocation9 + $0x78] sm:$0xff] %v589
    $region41: #{tpu_custom_call.1} parent=1 // pred_fallthru
      _
    // Predicated region
    $region42: #{tpu_custom_call.1} parent=1 // pred_check
      _
    $region43: #{tpu_custom_call.1} parent=1 // pred_check_branch
      %607 = sbr.rel (0) target = $region45
    $region44: #{tpu_custom_call.1} parent=1 // pred_region
      %s609 = ssub.s32 2048, 2048
      %610 = vsyncadd [#allocation5], %s609
      %s611 = sshll.u32 [#allocation9], 4
      %s612 = int_to_ptr.vmem [resolvable:$true] %s611
      %617 = dma.vmem_to_hbm [thread:$0]  %s612, 2048, %s5, [#allocation5], 128, 128, 8
    $region45: #{tpu_custom_call.1} parent=1 // pred_fallthru
      _
    // Predicated region
    $region46: #{tpu_custom_call.1} parent=1 // pred_check
      _
    $region47: #{tpu_custom_call.1} parent=1 // pred_check_branch
      %619 = sbr.rel (0) target = $region49
    $region48: #{tpu_custom_call.1} parent=1 // pred_region
      %620 = dma.done [#allocation5], 2048
    $region49: #{tpu_custom_call.1} parent=1 // pred_fallthru
      _
    %621 = vsyncpa [#allocation4], 1
    %622 = vsyncpa [#allocation7], 1
    %623 = vsyncpa [#allocation5], 1

</llo_original>
